<compile_context>
chip_gen: v7x
topology: tpu7x:2x2x1
jax: 0.10.0
libtpu: 0.0.40
codegen_flags: <defaults>
</compile_context>

<pallas_src>
import jax
import jax.numpy as jnp
from jax.experimental import pallas as pl
from jax.experimental.pallas import tpu as pltpu


_LANE_CANDIDATES = (2048, 1024, 512, 256, 128)  # all lane-dense (multiples of 128)


def make_lambda_layer(
    f,
    *,
    target_block_bytes=4 * 1024 * 1024,
    min_pallas_bytes=256 * 1024,
    donate_input=False,
):
    """Returns a callable applying the elementwise lambda `f` via Pallas."""

    def kernel(x_ref, o_ref):
        # Whole-tile elementwise apply of the user lambda on the VPU.
        o_ref[...] = f(x_ref[...])

    def apply(x):
        # TODO(synk): LambdaLayer's `f` is arbitrary in PyTorch; only
        # elementwise, shape-preserving lambdas are lowered into this kernel
        # (reshape/pool-style lambdas would need dedicated kernels).
        orig_shape = x.shape
        in_dtype = x.dtype

        # Probe f: must be elementwise / shape-preserving for this path.
        probe = jax.ShapeDtypeStruct((8, 128), in_dtype)
        out_aval = jax.eval_shape(f, probe)
        assert out_aval.shape == (8, 128), (
            "LambdaLayer Pallas path only supports elementwise, "
            "shape-preserving lambdas.")
        out_dtype = out_aval.dtype

        total = x.size
        itemsize_in = jnp.dtype(in_dtype).itemsize
        itemsize_out = jnp.dtype(out_dtype).itemsize

        # Size gate: sub-~256 KiB inputs are dominated by kernel-call fixed
        # overhead; XLA's fused elementwise is already at roofline there.
        if total * itemsize_in < min_pallas_bytes:
            return f(x)

        # Sublane packing multiple from the narrower of in/out dtypes so the
        # output block stays sublane-dense for dtype-narrowing lambdas too
        # (8 for f32, 16 for bf16, 32 for int8).
        sublane_mult = max(8, 32 // min(itemsize_in, itemsize_out))

        # Lane width: largest candidate dividing total (no pad / no trailing
        # slice = no extra HBM passes); prefer one that also yields >= one
        # full sublane tile of rows.
        divisors = [c for c in _LANE_CANDIDATES if total % c == 0]
        L = None
        for cand in divisors:
            if total // cand >= sublane_mult:
                L = cand
                break
        if L is None and divisors:
            L = divisors[0]
        if L is None:
            L = 128  # general fallback: minimal pad to a lane multiple

        padded_total = pl.cdiv(total, L) * L
        needs_pad = padded_total != total

        x_flat = x.reshape(-1)
        if needs_pad:
            # Fallback only for sizes not divisible by 128 (costs one extra
            # HBM pass each way); typical NCHW activation sizes never hit it.
            x_flat = jnp.pad(x_flat, (0, padded_total - total))
        rows = padded_total // L
        x2 = x_flat.reshape(rows, L)

        # Block rows: ~target_block_bytes per block, rounded to the sublane
        # packing multiple.  Cap so the grid has >= 2 steps whenever possible
        # (both v7x TensorCores stream); ragged last block is masked by Pallas.
        if rows < sublane_mult:
            block_rows = rows  # block equals full array dims -> always legal
        else:
            bytes_per_row = L * max(itemsize_in, itemsize_out)
            block_rows = max(
                sublane_mult,
                (target_block_bytes // bytes_per_row)
                // sublane_mult * sublane_mult)
            if rows >= 2 * sublane_mult:
                half = max(sublane_mult,
                           (pl.cdiv(rows, 2) // sublane_mult) * sublane_mult)
                block_rows = min(block_rows, half)
            block_rows = min(block_rows, rows)

        grid = (pl.cdiv(rows, block_rows),)

        # VMEM budget: double-buffered in+out blocks with 50% headroom,
        # clamped to [16 MiB, 64 MiB] (keeps v7x's 64 MiB physical VMEM safe
        # while still allowing large blocks on v5e/v6e).
        block_bytes = block_rows * L * (itemsize_in + itemsize_out)
        vmem_limit = int(min(64 * 1024 * 1024,
                             max(16 * 1024 * 1024, 3 * block_bytes)))

        aliases = {}
        if donate_input and out_dtype == in_dtype and not needs_pad:
            aliases = {0: 0}

        out2 = pl.pallas_call(
            kernel,
            out_shape=jax.ShapeDtypeStruct((rows, L), out_dtype),
            grid_spec=pltpu.PrefetchScalarGridSpec(
                num_scalar_prefetch=0,
                grid=grid,
                in_specs=[pl.BlockSpec((block_rows, L), lambda i: (i, 0))],
                out_specs=pl.BlockSpec((block_rows, L), lambda i: (i, 0)),
            ),
            compiler_params=pltpu.CompilerParams(
                dimension_semantics=("parallel",),
                vmem_limit_bytes=vmem_limit,
            ),
            input_output_aliases=aliases,
        )(x2)

        out_flat = out2.reshape(-1)
        if needs_pad:
            out_flat = out_flat[:total]
        return out_flat.reshape(orig_shape)

    return apply


if __name__ == "__main__":
    # The concrete lambda this LambdaLayer wraps in the example:
    # f(x) = 2 * leaky_relu(x, 0.2)
    f = lambda x: 2.0 * jnp.where(x > 0, x, 0.2 * x)

    # min_pallas_bytes=0 so the small demo input actually exercises the Pallas
    # kernel (the default gate would hand an 8 KiB input straight to XLA).
    lambda_layer = make_lambda_layer(f, min_pallas_bytes=0)

    key = jax.random.PRNGKey(0)
    x = jax.random.normal(key, (2, 4, 16, 16), dtype=jnp.float32)  # NCHW

    out = jax.block_until_ready(lambda_layer(x))

    # Pure-JAX reference of forward(x) = f(x).
    ref = f(x)
    assert out.shape == ref.shape and out.dtype == ref.dtype
    assert jnp.allclose(out, ref, atol=1e-6, rtol=1e-6)

    print("KERNEL_OK")
</pallas_src>

<mosaic_0001>
module attributes {stable_mosaic.version = 11 : i64} {
  func.func @kernel(%arg0: i32, %arg1: memref<8x256xf32, #tpu.memory_space<vmem>>, %arg2: memref<8x256xf32, #tpu.memory_space<vmem>>) attributes {dimension_semantics = [#tpu.dimension_semantics<parallel>], iteration_bounds = array<i64: 1>, scalar_prefetch = 0 : i64, scratch_operands = 0 : i64, tpu.core_type = #tpu.core_type<tc>, window_params = [{transform_indices = @transform_0, window_bounds = array<i64: 8, 256>}, {transform_indices = @transform_1, window_bounds = array<i64: 8, 256>}]} {
    %c0 = arith.constant 0 : index
    %c0_0 = arith.constant 0 : index
    %0 = vector.load %arg1[%c0, %c0_0] : memref<8x256xf32, #tpu.memory_space<vmem>>, vector<8x256xf32>
    %cst = arith.constant 0.000000e+00 : f32
    %1 = vector.broadcast %cst : f32 to vector<8x256xf32>
    %2 = arith.cmpf ogt, %0, %1 : vector<8x256xf32>
    %cst_1 = arith.constant 2.000000e-01 : f32
    %3 = vector.broadcast %cst_1 : f32 to vector<8x256xf32>
    %4 = arith.mulf %3, %0 : vector<8x256xf32>
    %5 = arith.select %2, %0, %4 : vector<8x256xi1>, vector<8x256xf32>
    %cst_2 = arith.constant 2.000000e+00 : f32
    %6 = vector.broadcast %cst_2 : f32 to vector<8x256xf32>
    %7 = arith.mulf %6, %5 : vector<8x256xf32>
    %c0_3 = arith.constant 0 : index
    %c0_4 = arith.constant 0 : index
    %8 = vector.load %arg2[%c0_3, %c0_4] : memref<8x256xf32, #tpu.memory_space<vmem>>, vector<8x256xf32>
    tpu.vector_store %arg2[%c0_3, %c0_4], %7 {strides = array<i32>} : memref<8x256xf32, #tpu.memory_space<vmem>>, vector<8x256xf32>,
    return
  }
  func.func @transform_0(%arg0: i32) -> (i32, i32) {
    %c0_i32 = arith.constant 0 : i32
    %c0_i32_0 = arith.constant 0 : i32
    return %arg0, %c0_i32 : i32, i32
  }
  func.func @transform_1(%arg0: i32) -> (i32, i32) {
    %c0_i32 = arith.constant 0 : i32
    %c0_i32_0 = arith.constant 0 : i32
    return %arg0, %c0_i32 : i32, i32
  }
}

</mosaic_0001>

<llo_original>
// kernel: tpu_custom_call.1
$region0: #{tpu_custom_call.1}
  #allocation0 [shape = 'u32[]', space=smem, size = 0x4, offset = 0x4, fixed_abs, tag = 'smem constant byte address 0x4 - core index']
  #allocation1 [shape = 'u32[144,128]{1,0:T(1,128)}', space=vmem, size = 0x12000, scoped, tag = 'internal scratch']
  %s0 = inlined_call_operand.hbm [shape: f32[8,256], index: 0, kind: input, shape index: {}]
  %s1 = inlined_call_operand.hbm [shape: f32[8,256], index: 1, kind: output, shape index: {}]
  %s2 = sld [smem:[#allocation0]]
  $region18: #{tpu_custom_call.1} parent=0
    _
  %s4 = ssub.s32 1, %s2
  %s5 = scalar_select 0, %s4, %s2
  $region1: #{tpu_custom_call.1} parent=0
    #allocation2 [shape = 'u8[8192]{0}', space=vmem, size = 0x2000, scoped, tag = 'input window, operand 0, single buffered']
    #allocation3 [shape = 's32[1]{0}', space=sflag, size = 0x4, scoped, tag = 'scoped memory for tpu_custom_call.1']
    #allocation4 [shape = 's32[1]{0}', space=sflag, size = 0x4, scoped, tag = 'scoped memory for tpu_custom_call.1']
    #allocation5 [shape = 'u8[8192]{0}', space=vmem, size = 0x2000, scoped, tag = 'output window, operand 0, single buffered']
    %6 = vsyncpa [#allocation3], 0
    %7 = vsyncpa [#allocation4], 0
    // Predicated region
    $region2: #{tpu_custom_call.1} parent=1 // pred_check
      _
    $region3: #{tpu_custom_call.1} parent=1 // pred_check_branch
      %9 = sbr.rel (0) target = $region5
    $region4: #{tpu_custom_call.1} parent=1 // pred_region
      %s11 = ssub.s32 256, 256
      %12 = vsyncadd [#allocation3], %s11
      %s14 = sshll.u32 [#allocation2], 4
      %s15 = int_to_ptr.vmem [resolvable:$true] %s14
      %17 = dma.hbm_to_vmem [thread:$0]  %s0, 256, %s15, [#allocation3]
    $region5: #{tpu_custom_call.1} parent=1 // pred_fallthru
      _
    // Predicated region
    $region6: #{tpu_custom_call.1} parent=1 // pred_check
      _
    $region7: #{tpu_custom_call.1} parent=1 // pred_check_branch
      %19 = sbr.rel (0) target = $region9
    $region8: #{tpu_custom_call.1} parent=1 // pred_region
      %20 = dma.done [#allocation3], 256
    $region9: #{tpu_custom_call.1} parent=1 // pred_fallthru
      _
    %v21 = vld [vmem:[#allocation2] sm:$0xff]
    %v22 = vld [vmem:[#allocation2 + $0x8] sm:$0xff]
    %vm23 = vcmp.gt.f32.partialorder %v21, 0.0
    %vm24 = vcmp.gt.f32.partialorder %v22, 0.0
    %v25 = vmul.f32 %v21, 0.2
    %v26 = vmul.f32 %v22, 0.2
    %v27 = vsel %vm23, %v21, %v25
    %v28 = vsel %vm24, %v22, %v26
    %v29 = vmul.f32 %v27, 2.0
    %v30 = vmul.f32 %v28, 2.0
    %31 = vst [vmem:[#allocation5] sm:$0xff] %v29
    %32 = vst [vmem:[#allocation5 + $0x8] sm:$0xff] %v30
    // Predicated region
    $region10: #{tpu_custom_call.1} parent=1 // pred_check
      _
    $region11: #{tpu_custom_call.1} parent=1 // pred_check_branch
      %34 = sbr.rel (0) target = $region13
    $region12: #{tpu_custom_call.1} parent=1 // pred_region
      %s36 = ssub.s32 256, 256
      %37 = vsyncadd [#allocation4], %s36
      %s39 = sshll.u32 [#allocation5], 4
      %s40 = int_to_ptr.vmem [resolvable:$true] %s39
      %42 = dma.vmem_to_hbm [thread:$0]  %s40, 256, %s1, [#allocation4]
    $region13: #{tpu_custom_call.1} parent=1 // pred_fallthru
      _
    // Predicated region
    $region14: #{tpu_custom_call.1} parent=1 // pred_check
      _
    $region15: #{tpu_custom_call.1} parent=1 // pred_check_branch
      %44 = sbr.rel (0) target = $region17
    $region16: #{tpu_custom_call.1} parent=1 // pred_region
      %45 = dma.done [#allocation4], 256
    $region17: #{tpu_custom_call.1} parent=1 // pred_fallthru
      _
    %46 = vsyncpa [#allocation3], 1
    %47 = vsyncpa [#allocation4], 1

</llo_original>
